<compile_context>
chip_gen: v6e
topology: v6e:2x2x1
jax: 0.10.0
libtpu: 0.0.40
codegen_flags: <defaults>
</compile_context>

<pallas_src>
import jax
import jax.numpy as jnp
from jax.experimental import pallas as pl
from jax.experimental.pallas import tpu as pltpu


def _scale_convert_kernel(x_ref, o_ref):
    # x_ref: uint8 tile in VMEM. Widen in-register (zero-extend -> f32) and scale
    # into [0, 1]  ==  img_as_float for uint8 input. All cast work stays on the
    # VPU; HBM traffic is 1 B/elem in + 4 B/elem out.
    x = x_ref[...].astype(jnp.int32).astype(jnp.float32)
    o_ref[...] = x * (1.0 / 255.0)


def scale_and_convert(x_u8):
    """x_u8: uint8 array (any shape). Returns float32 in [0, 1], squeezed."""
    # --- glue: squeeze size-1 dims ------------------------------------------
    x_sq = jnp.squeeze(x_u8)
    out_shape = x_sq.shape
    n = 1
    for d in out_shape:
        n *= d

    # --- pick a lane-dense 2D layout (rows, L), L a multiple of 128 if possible
    lane = None
    for cand in (8192, 4096, 2048, 1024, 512, 256, 128):
        if n % cand == 0:
            lane = cand
            break
    if lane is None:
        # fall back to the natural last dim (block will span the full dim, legal)
        lane = out_shape[-1] if len(out_shape) >= 1 else 1
        lane = max(lane, 1)
    rows = max(n // lane, 1)
    x2d = x_sq.reshape(rows, lane)

    # --- row tile: ~<=512K elems/block, multiple of 32 (uint8 sublane tiling) ---
    max_block_elems = 512 * 1024
    tile_r = max(1, max_block_elems // lane)
    tile_r = (tile_r // 32) * 32
    if tile_r < 32:
        tile_r = 32
    tile_r = min(tile_r, rows)  # full-extent block when rows is small (always legal)

    grid = (pl.cdiv(rows, tile_r),)  # partial last block handled by Pallas padding

    out2d = pl.pallas_call(
        _scale_convert_kernel,
        out_shape=jax.ShapeDtypeStruct((rows, lane), jnp.float32),
        grid=grid,
        in_specs=[pl.BlockSpec((tile_r, lane), lambda i: (i, 0))],
        out_specs=pl.BlockSpec((tile_r, lane), lambda i: (i, 0)),
        compiler_params=pltpu.CompilerParams(
            dimension_semantics=("parallel",)
        ),
    )(x2d)

    return out2d.reshape(out_shape)


if __name__ == "__main__":
    key = jax.random.PRNGKey(0)

    # Small NCHW uint8 "image" tensor with a size-1 batch dim so squeeze matters.
    # N = 4*16*16 = 1024 -> lane-dense (1, 1024) slab inside the kernel.
    x_int = jax.random.randint(key, (1, 4, 16, 16), 0, 256, dtype=jnp.int32)
    x = x_int.astype(jnp.uint8)

    y = scale_and_convert(x)
    y = jax.block_until_ready(y)

    y_ref = jnp.squeeze(x).astype(jnp.float32) / 255.0
    assert y.shape == (4, 16, 16), y.shape
    assert y.dtype == jnp.float32
    assert jnp.max(jnp.abs(y - y_ref)) < 1e-6

    # Second check: awkward shape (element count not a multiple of 128) exercises
    # the (C*H, W) fallback layout.
    key2 = jax.random.PRNGKey(0)
    x2_int = jax.random.randint(key2, (1, 3, 37, 21), 0, 256, dtype=jnp.int32)
    x2 = x2_int.astype(jnp.uint8)
    y2 = jax.block_until_ready(scale_and_convert(x2))
    y2_ref = jnp.squeeze(x2).astype(jnp.float32) / 255.0
    assert y2.shape == (3, 37, 21), y2.shape
    assert jnp.max(jnp.abs(y2 - y2_ref)) < 1e-6

    print("KERNEL_OK")
</pallas_src>

<mosaic_0001>
module attributes {stable_mosaic.version = 11 : i64} {
  func.func @_scale_convert_kernel(%arg0: i32, %arg1: memref<1x1024xi8, #tpu.memory_space<vmem>>, %arg2: memref<1x1024xf32, #tpu.memory_space<vmem>>) attributes {dimension_semantics = [#tpu.dimension_semantics<parallel>], iteration_bounds = array<i64: 1>, scalar_prefetch = 0 : i64, scratch_operands = 0 : i64, tpu.core_type = #tpu.core_type<tc>, window_params = [{transform_indices = @transform_0, window_bounds = array<i64: 1, 1024>}, {transform_indices = @transform_1, window_bounds = array<i64: 1, 1024>}]} {
    %c0 = arith.constant 0 : index
    %c0_0 = arith.constant 0 : index
    %0 = vector.load %arg1[%c0, %c0_0] : memref<1x1024xi8, #tpu.memory_space<vmem>>, vector<1x1024xi8>
    %1 = arith.extui %0 : vector<1x1024xi8> to vector<1x1024xi32>
    %2 = arith.sitofp %1 : vector<1x1024xi32> to vector<1x1024xf32>
    %cst = arith.constant 0.00392156886 : f32
    %3 = vector.broadcast %cst : f32 to vector<1x1024xf32>
    %4 = arith.mulf %2, %3 : vector<1x1024xf32>
    %c0_1 = arith.constant 0 : index
    %c0_2 = arith.constant 0 : index
    %5 = vector.load %arg2[%c0_1, %c0_2] : memref<1x1024xf32, #tpu.memory_space<vmem>>, vector<1x1024xf32>
    tpu.vector_store %arg2[%c0_1, %c0_2], %4 {strides = array<i32>} : memref<1x1024xf32, #tpu.memory_space<vmem>>, vector<1x1024xf32>,
    return
  }
  func.func @transform_0(%arg0: i32) -> (i32, i32) {
    %c0_i32 = arith.constant 0 : i32
    %c0_i32_0 = arith.constant 0 : i32
    return %arg0, %c0_i32 : i32, i32
  }
  func.func @transform_1(%arg0: i32) -> (i32, i32) {
    %c0_i32 = arith.constant 0 : i32
    %c0_i32_0 = arith.constant 0 : i32
    return %arg0, %c0_i32 : i32, i32
  }
}

</mosaic_0001>

<llo_original>
// kernel: tpu_custom_call.1
$region0: #{tpu_custom_call.1}
  #allocation0 [shape = 'u32[]', space=smem, size = 0x4, offset = 0x4, fixed_abs, tag = 'smem constant byte address 0x4 - core index']
  #allocation1 [shape = 'u32[144,128]{1,0:T(1,128)}', space=vmem, size = 0x12000, scoped, tag = 'internal scratch']
  %s0 = inlined_call_operand.hbm [shape: u8[1,1024], index: 0, kind: input, shape index: {}]
  %s1 = inlined_call_operand.hbm [shape: f32[1,1024], index: 1, kind: output, shape index: {}]
  %s2 = sld [smem:[#allocation0]]
  $region18: #{tpu_custom_call.1} parent=0
    _
  %s4 = ssub.s32 1, %s2
  %s5 = scalar_select 0, %s4, %s2
  $region1: #{tpu_custom_call.1} parent=0
    #allocation2 [shape = 'u8[4096]{0}', space=vmem, size = 0x1000, scoped, tag = 'input window, operand 0, single buffered']
    #allocation3 [shape = 's32[1]{0}', space=sflag, size = 0x4, scoped, tag = 'scoped memory for tpu_custom_call.1']
    #allocation4 [shape = 's32[1]{0}', space=sflag, size = 0x4, scoped, tag = 'scoped memory for tpu_custom_call.1']
    #allocation5 [shape = 'u8[4096]{0}', space=vmem, size = 0x1000, scoped, tag = 'output window, operand 0, single buffered']
    %6 = vsyncpa [#allocation3], 0
    %7 = vsyncpa [#allocation4], 0
    // Predicated region
    $region2: #{tpu_custom_call.1} parent=1 // pred_check
      _
    $region3: #{tpu_custom_call.1} parent=1 // pred_check_branch
      %9 = sbr.rel (0) target = $region5
    $region4: #{tpu_custom_call.1} parent=1 // pred_region
      %s11 = ssub.s32 128, 128
      %12 = vsyncadd [#allocation3], %s11
      %s14 = sshll.u32 [#allocation2], 4
      %s15 = int_to_ptr.vmem [resolvable:$true] %s14
      %17 = dma.hbm_to_vmem [thread:$0]  %s0, 128, %s15, [#allocation3]
    $region5: #{tpu_custom_call.1} parent=1 // pred_fallthru
      _
    // Predicated region
    $region6: #{tpu_custom_call.1} parent=1 // pred_check
      _
    $region7: #{tpu_custom_call.1} parent=1 // pred_check_branch
      %19 = sbr.rel (0) target = $region9
    $region8: #{tpu_custom_call.1} parent=1 // pred_region
      %20 = dma.done [#allocation3], 128
    $region9: #{tpu_custom_call.1} parent=1 // pred_fallthru
      _
    %v21 = vld [vmem:[#allocation2] sm:$0xff]
    %v22 = vunpack.c.0.s8 %v21
    %v23 = vunpack.c.1.s8 %v21
    %v24 = vunpack.c.2.s8 %v21
    %v25 = vunpack.c.3.s8 %v21
    %v26 = vand.u32 %v22, 255
    %v27 = vand.u32 %v23, 255
    %v28 = vand.u32 %v24, 255
    %v29 = vand.u32 %v25, 255
    %v30 = vcvt.s32.f32 %v26
    %v31 = vcvt.s32.f32 %v27
    %v32 = vcvt.s32.f32 %v28
    %v33 = vcvt.s32.f32 %v29
    %v34 = vmul.f32 %v30, 0.003921569
    %v35 = vmul.f32 %v31, 0.003921569
    %v36 = vmul.f32 %v32, 0.003921569
    %v37 = vmul.f32 %v33, 0.003921569
    %v43 = vunpack.c.l.s4 1966171168
    %v44 = vunpack.c.0.s8 %v43
    %v45 = vlaneseq
    %v46 = vshrl.u32 %v45, 7
    %v47 = vsub.s32 %v44, %v46
    %v48 = vrot.slane %v34, %v47
    %v50 = vunpack.c.l.s4 1966171168
    %v51 = vunpack.c.0.s8 %v50
    %v52 = vlaneseq
    %v53 = vshrl.u32 %v52, 7
    %v54 = vsub.s32 %v51, %v53
    %v55 = vrot.slane %v35, %v54
    %v57 = vunpack.c.l.s4 1966171168
    %v58 = vunpack.c.0.s8 %v57
    %v59 = vlaneseq
    %v60 = vshrl.u32 %v59, 7
    %v61 = vsub.s32 %v58, %v60
    %v62 = vrot.slane %v36, %v61
    %v64 = vunpack.c.l.s4 1966171168
    %v65 = vunpack.c.0.s8 %v64
    %v66 = vlaneseq
    %v67 = vshrl.u32 %v66, 7
    %v68 = vsub.s32 %v65, %v67
    %v69 = vrot.slane %v37, %v68
    %v70 = vcombine.low %v48, %v55
    %v71 = vcombine.low %v62, %v69
    %v73 = vunpack.c.l.s4 1966171168
    %v74 = vunpack.c.0.s8 %v73
    %v75 = vlaneseq
    %v76 = vshrl.u32 %v75, 7
    %v77 = vsub.s32 %v74, %v76
    %v78 = vrot.slane %v70, %v77
    %v80 = vunpack.c.l.s4 1966171168
    %v81 = vunpack.c.0.s8 %v80
    %v82 = vlaneseq
    %v83 = vshrl.u32 %v82, 7
    %v84 = vsub.s32 %v81, %v83
    %v85 = vrot.slane %v71, %v84
    %v86 = vcombine.low %v78, %v85
    %88 = vst [vmem:[#allocation5] sm:$0xff] %v86
    // Predicated region
    $region10: #{tpu_custom_call.1} parent=1 // pred_check
      _
    $region11: #{tpu_custom_call.1} parent=1 // pred_check_branch
      %90 = sbr.rel (0) target = $region13
    $region12: #{tpu_custom_call.1} parent=1 // pred_region
      %s92 = ssub.s32 128, 128
      %93 = vsyncadd [#allocation4], %s92
      %s95 = sshll.u32 [#allocation5], 4
      %s96 = int_to_ptr.vmem [resolvable:$true] %s95
      %98 = dma.vmem_to_hbm [thread:$0]  %s96, 128, %s1, [#allocation4]
    $region13: #{tpu_custom_call.1} parent=1 // pred_fallthru
      _
    // Predicated region
    $region14: #{tpu_custom_call.1} parent=1 // pred_check
      _
    $region15: #{tpu_custom_call.1} parent=1 // pred_check_branch
      %100 = sbr.rel (0) target = $region17
    $region16: #{tpu_custom_call.1} parent=1 // pred_region
      %101 = dma.done [#allocation4], 128
    $region17: #{tpu_custom_call.1} parent=1 // pred_fallthru
      _
    %102 = vsyncpa [#allocation3], 1
    %103 = vsyncpa [#allocation4], 1

</llo_original>
